<compile_context>
chip_gen: v7x
topology: tpu7x:2x2x1
jax: 0.10.0
libtpu: 0.0.40
codegen_flags: <defaults>
</compile_context>

<pallas_src>
import jax
import jax.numpy as jnp
import numpy as np
from jax.experimental import pallas as pl
from jax.experimental.pallas import tpu as pltpu


# ----------------------------------------------------------------------------
# helpers
# ----------------------------------------------------------------------------
def _pick_batch_tile(B, preferred=8):
    """Backbone batch tile. Returns (TB, padded_B). TB is either the full batch
    (<=8) or 8 (multiple of 8 -> unmasked full-vreg output stores)."""
    if B <= preferred:
        return B, B
    TB = preferred
    Bp = ((B + TB - 1) // TB) * TB
    return TB, Bp


def _pick_vocab_tile(V, preferred=2048):
    """Vocab tile. Returns (TN, padded_V). TN=2048 with bf16 weights keeps the
    double-buffered (F, TN) tile ~16 MiB at F=2048: safe on v5e/v6e (128 MiB
    VMEM) and v7x (64 MiB). Drop `preferred` to 1024 for f32 weights on v7x."""
    if V <= preferred:
        return V, V
    TN = (preferred // 128) * 128
    Vp = ((V + TN - 1) // TN) * TN
    return TN, Vp


def _vmem_limit_bytes(streamed_bytes, resident_bytes):
    """Explicit scoped-VMEM budget: double-buffered streamed blocks + residents,
    clamped with headroom below v7x's 64 MiB physical VMEM."""
    est = 2 * int(streamed_bytes) + int(resident_bytes) + (4 << 20)
    return int(min(max(est, 16 << 20), 48 << 20))


# ----------------------------------------------------------------------------
# Kernel 1: synthetic CNN backbone stage (1x1 conv + ReLU + global avg pool)
#   consumes NCHW tiles directly; conv done as C VPU multiply-adds; pool is a
#   lane reduction. Grid over batch tiles ("parallel").
# ----------------------------------------------------------------------------
def backbone_kernel(x_ref, wt_ref, o_ref):
    # x_ref: (TB, C, HW) streamed NCHW tile; wt_ref: (F, C) resident; o_ref: (TB, F)
    x = x_ref[...]
    wt = wt_ref[...]
    TB, C, HW = x_ref.shape
    F = wt_ref.shape[0]
    # 1x1 conv as C VPU multiply-adds: K=C is far too small to feed the MXU.
    # TODO(synk): a real ResNet stage would use im2col so K = k^2*C >= 128.
    h = jnp.zeros((TB, F, HW), jnp.float32)
    for c in range(C):                                   # static unroll, C tiny
        h = h + wt[:, c:c + 1][None, :, :] * x[:, c:c + 1, :]
    h = jnp.maximum(h, 0.0)                              # ReLU
    o_ref[...] = jnp.mean(h, axis=-1)                    # global average pool


def backbone(x_nchw, conv_w):
    """x_nchw: (B, C, H, W) f32; conv_w: (C, F). Returns (B, F) f32."""
    B, C, H, W = x_nchw.shape
    F = conv_w.shape[1]
    HW = H * W
    TB, Bp = _pick_batch_tile(B)

    x = x_nchw.reshape(B, C, HW)                         # free reshape, stays NCHW
    if Bp != B:
        x = jnp.pad(x, ((0, Bp - B), (0, 0), (0, 0)))
    wt = conv_w.T                                        # (F, C), tiny

    itemsize = 4
    streamed = (TB * C * HW + TB * F) * itemsize         # x tile + out tile
    resident = F * C * itemsize                          # weight

    out = pl.pallas_call(
        backbone_kernel,
        out_shape=jax.ShapeDtypeStruct((Bp, F), jnp.float32),
        grid_spec=pltpu.PrefetchScalarGridSpec(
            num_scalar_prefetch=0,
            grid=(Bp // TB,),
            in_specs=[
                pl.BlockSpec((TB, C, HW), lambda i: (i, 0, 0)),  # streamed rows
                pl.BlockSpec((F, C), lambda i: (0, 0)),          # resident weight
            ],
            out_specs=pl.BlockSpec((TB, F), lambda i: (i, 0)),
        ),
        compiler_params=pltpu.CompilerParams(
            dimension_semantics=("parallel",),
            vmem_limit_bytes=_vmem_limit_bytes(streamed, resident),
        ),
    )(x, wt)
    return out[:B] if Bp != B else out


# ----------------------------------------------------------------------------
# Kernel 2: fused Linear + BatchNorm1d (training mode: batch statistics),
#   tiled along the vocab axis; every V-tile's statistics are independent.
#   Matmul inputs in bf16 (HBM-bound on weight streaming), f32 accumulation,
#   f32 bias / BN epilogue.
# ----------------------------------------------------------------------------
def linear_bn_kernel(x_ref, w_ref, bgb_ref, o_ref):
    # x_ref: (B, F) bf16 resident; w_ref: (F, TN) bf16 streamed;
    # bgb_ref: (3, TN) f32 = [bias; gamma; beta]; o_ref: (B, TN) f32.
    eps = 1e-5
    y = jnp.dot(x_ref[...], w_ref[...],
                preferred_element_type=jnp.float32) + bgb_ref[0:1, :]
    mean = jnp.mean(y, axis=0, keepdims=True)                   # (1, TN)
    var = jnp.mean((y - mean) ** 2, axis=0, keepdims=True)      # biased, as in BN
    y_hat = (y - mean) * jax.lax.rsqrt(var + eps)
    o_ref[...] = bgb_ref[1:2, :] * y_hat + bgb_ref[2:3, :]


def linear_bn(feats, w, b, gamma, beta):
    """feats: (B, F); w: (F, V); b, gamma, beta: (V,). Returns (B, V) f32."""
    B, F = feats.shape
    V = w.shape[1]
    TN, Vp = _pick_vocab_tile(V)

    feats_bf = feats.astype(jnp.bfloat16)
    w_bf = w.astype(jnp.bfloat16)
    bgb = jnp.stack([b, gamma, beta], axis=0).astype(jnp.float32)   # (3, V)

    if Vp != V:
        w_bf = jnp.pad(w_bf, ((0, 0), (0, Vp - V)))   # zero-pad tail columns
        bgb = jnp.pad(bgb, ((0, 0), (0, Vp - V)))     # padded cols -> BN output 0

    streamed = F * TN * 2 + B * TN * 4 + 3 * TN * 4   # weight / out / vec tiles
    resident = B * F * 2                              # bf16 activations

    out = pl.pallas_call(
        linear_bn_kernel,
        out_shape=jax.ShapeDtypeStruct((B, Vp), jnp.float32),
        grid_spec=pltpu.PrefetchScalarGridSpec(
            num_scalar_prefetch=0,
            grid=(Vp // TN,),
            in_specs=[
                pl.BlockSpec((B, F), lambda j: (0, 0)),    # resident activations
                pl.BlockSpec((F, TN), lambda j: (0, j)),   # streamed bf16 weights
                pl.BlockSpec((3, TN), lambda j: (0, j)),   # packed bias/gamma/beta
            ],
            out_specs=pl.BlockSpec((B, TN), lambda j: (0, j)),
        ),
        compiler_params=pltpu.CompilerParams(
            dimension_semantics=("parallel",),
            vmem_limit_bytes=_vmem_limit_bytes(streamed, resident),
        ),
    )(feats_bf, w_bf, bgb)
    return out[:, :V] if Vp != V else out


# ----------------------------------------------------------------------------
# Full EncoderCNN forward + plain-JAX reference
# ----------------------------------------------------------------------------
def encoder_cnn_forward(images, params):
    feats = backbone(images, params["conv_w"])                      # (B, feat_dim)
    return linear_bn(feats, params["lin_w"], params["lin_b"],
                     params["bn_gamma"], params["bn_beta"])         # (B, vocab)


def encoder_cnn_reference(images, params):
    B, C, H, W = images.shape
    x = images.reshape(B, C, H * W)
    h = jnp.maximum(jnp.einsum("bcp,cf->bpf", x, params["conv_w"]), 0.0)
    feats = jnp.mean(h, axis=1)                                     # (B, F)
    # Mirror the kernel's bf16 matmul inputs (f32 accumulation) so the check
    # stays tight; BN statistics and epilogue are f32 in both paths.
    fb = feats.astype(jnp.bfloat16).astype(jnp.float32)
    wb = params["lin_w"].astype(jnp.bfloat16).astype(jnp.float32)
    y = fb @ wb + params["lin_b"]
    mean = jnp.mean(y, axis=0, keepdims=True)
    var = jnp.mean((y - mean) ** 2, axis=0, keepdims=True)
    return params["bn_gamma"] * (y - mean) / jnp.sqrt(var + 1e-5) + params["bn_beta"]


if __name__ == "__main__":
    # Small shapes consistent with the module's forward:
    #   images (B, C, H, W); feat_dim stands in for resnet.fc.in_features (2048);
    #   vocab_size = Linear / BatchNorm1d width.
    B, C, H, W = 2, 4, 16, 16
    feat_dim = 32
    vocab_size = 64

    key = jax.random.PRNGKey(0)
    k_img, k_conv, k_lw, k_lb, k_g, k_b = jax.random.split(key, 6)

    images = jax.random.normal(k_img, (B, C, H, W), dtype=jnp.float32)

    params = {
        "conv_w":  jax.random.normal(k_conv, (C, feat_dim), jnp.float32) * 0.1,
        "lin_w":   jax.random.normal(k_lw, (feat_dim, vocab_size), jnp.float32) * 0.1,
        "lin_b":   jax.random.normal(k_lb, (vocab_size,), jnp.float32) * 0.1,
        "bn_gamma": jnp.ones((vocab_size,), jnp.float32)
                    + 0.01 * jax.random.normal(k_g, (vocab_size,), jnp.float32),
        "bn_beta":  0.01 * jax.random.normal(k_b, (vocab_size,), jnp.float32),
    }

    out = encoder_cnn_forward(images, params)
    out = jax.block_until_ready(out)

    ref = encoder_cnn_reference(images, params)
    np.testing.assert_allclose(np.asarray(out), np.asarray(ref),
                               rtol=2e-3, atol=2e-3)

    assert out.shape == (B, vocab_size) and out.dtype == jnp.float32
    print("KERNEL_OK")
</pallas_src>

<mosaic_0001>
module attributes {stable_mosaic.version = 11 : i64} {
  func.func @backbone_kernel(%arg0: i32, %arg1: memref<2x4x256xf32, #tpu.memory_space<vmem>>, %arg2: memref<32x4xf32, #tpu.memory_space<vmem>>, %arg3: memref<2x32xf32, #tpu.memory_space<vmem>>) attributes {dimension_semantics = [#tpu.dimension_semantics<parallel>], iteration_bounds = array<i64: 1>, scalar_prefetch = 0 : i64, scratch_operands = 0 : i64, tpu.core_type = #tpu.core_type<tc>, window_params = [{transform_indices = @transform_0, window_bounds = array<i64: 2, 4, 256>}, {pipeline_mode = #tpu.pipeline_mode<synchronous>, transform_indices = @transform_1, window_bounds = array<i64: 32, 4>}, {transform_indices = @transform_2, window_bounds = array<i64: 2, 32>}]} {
    %c0 = arith.constant 0 : index
    %c0_0 = arith.constant 0 : index
    %c0_1 = arith.constant 0 : index
    %0 = vector.load %arg1[%c0, %c0_0, %c0_1] : memref<2x4x256xf32, #tpu.memory_space<vmem>>, vector<2x4x256xf32>
    %c0_2 = arith.constant 0 : index
    %c0_3 = arith.constant 0 : index
    %1 = vector.load %arg2[%c0_2, %c0_3] : memref<32x4xf32, #tpu.memory_space<vmem>>, vector<32x4xf32>
    %cst = arith.constant 0.000000e+00 : f32
    %2 = vector.broadcast %cst : f32 to vector<2x32x256xf32>
    %3 = vector.extract_strided_slice %1 {offsets = [0, 0], sizes = [32, 1], strides = [1, 1]} : vector<32x4xf32> to vector<32x1xf32>
    %4 = vector.shape_cast %3 : vector<32x1xf32> to vector<1x32x1xf32>
    %5 = vector.extract_strided_slice %0 {offsets = [0, 0, 0], sizes = [2, 1, 256], strides = [1, 1, 1]} : vector<2x4x256xf32> to vector<2x1x256xf32>
    %6 = vector.broadcast %4 : vector<1x32x1xf32> to vector<2x32x256xf32>
    %7 = vector.broadcast %5 : vector<2x1x256xf32> to vector<2x32x256xf32>
    %8 = arith.mulf %6, %7 : vector<2x32x256xf32>
    %9 = arith.addf %2, %8 : vector<2x32x256xf32>
    %10 = vector.extract_strided_slice %1 {offsets = [0, 1], sizes = [32, 1], strides = [1, 1]} : vector<32x4xf32> to vector<32x1xf32>
    %11 = vector.shape_cast %10 : vector<32x1xf32> to vector<1x32x1xf32>
    %12 = vector.extract_strided_slice %0 {offsets = [0, 1, 0], sizes = [2, 1, 256], strides = [1, 1, 1]} : vector<2x4x256xf32> to vector<2x1x256xf32>
    %13 = vector.broadcast %11 : vector<1x32x1xf32> to vector<2x32x256xf32>
    %14 = vector.broadcast %12 : vector<2x1x256xf32> to vector<2x32x256xf32>
    %15 = arith.mulf %13, %14 : vector<2x32x256xf32>
    %16 = arith.addf %9, %15 : vector<2x32x256xf32>
    %17 = vector.extract_strided_slice %1 {offsets = [0, 2], sizes = [32, 1], strides = [1, 1]} : vector<32x4xf32> to vector<32x1xf32>
    %18 = vector.shape_cast %17 : vector<32x1xf32> to vector<1x32x1xf32>
    %19 = vector.extract_strided_slice %0 {offsets = [0, 2, 0], sizes = [2, 1, 256], strides = [1, 1, 1]} : vector<2x4x256xf32> to vector<2x1x256xf32>
    %20 = vector.broadcast %18 : vector<1x32x1xf32> to vector<2x32x256xf32>
    %21 = vector.broadcast %19 : vector<2x1x256xf32> to vector<2x32x256xf32>
    %22 = arith.mulf %20, %21 : vector<2x32x256xf32>
    %23 = arith.addf %16, %22 : vector<2x32x256xf32>
    %24 = vector.extract_strided_slice %1 {offsets = [0, 3], sizes = [32, 1], strides = [1, 1]} : vector<32x4xf32> to vector<32x1xf32>
    %25 = vector.shape_cast %24 : vector<32x1xf32> to vector<1x32x1xf32>
    %26 = vector.extract_strided_slice %0 {offsets = [0, 3, 0], sizes = [2, 1, 256], strides = [1, 1, 1]} : vector<2x4x256xf32> to vector<2x1x256xf32>
    %27 = vector.broadcast %25 : vector<1x32x1xf32> to vector<2x32x256xf32>
    %28 = vector.broadcast %26 : vector<2x1x256xf32> to vector<2x32x256xf32>
    %29 = arith.mulf %27, %28 : vector<2x32x256xf32>
    %30 = arith.addf %23, %29 : vector<2x32x256xf32>
    %cst_4 = arith.constant 0.000000e+00 : f32
    %31 = vector.broadcast %cst_4 : f32 to vector<2x32x256xf32>
    %32 = arith.maximumf %30, %31 : vector<2x32x256xf32>
    %cst_5 = arith.constant dense<0.000000e+00> : vector<2x32xf32>
    %33 = vector.multi_reduction <add>, %32, %cst_5 [2] : vector<2x32x256xf32> to vector<2x32xf32>
    %cst_6 = arith.constant 2.560000e+02 : f32
    %34 = vector.broadcast %cst_6 : f32 to vector<2x32xf32>
    %35 = arith.divf %33, %34 : vector<2x32xf32>
    %c0_7 = arith.constant 0 : index
    %c0_8 = arith.constant 0 : index
    %36 = vector.load %arg3[%c0_7, %c0_8] : memref<2x32xf32, #tpu.memory_space<vmem>>, vector<2x32xf32>
    tpu.vector_store %arg3[%c0_7, %c0_8], %35 {strides = array<i32>} : memref<2x32xf32, #tpu.memory_space<vmem>>, vector<2x32xf32>,
    return
  }
  func.func @transform_0(%arg0: i32) -> (i32, i32, i32) {
    %c0_i32 = arith.constant 0 : i32
    %c0_i32_0 = arith.constant 0 : i32
    %c0_i32_1 = arith.constant 0 : i32
    return %arg0, %c0_i32, %c0_i32_0 : i32, i32, i32
  }
  func.func @transform_1(%arg0: i32) -> (i32, i32) {
    %c0_i32 = arith.constant 0 : i32
    %c0_i32_0 = arith.constant 0 : i32
    %c0_i32_1 = arith.constant 0 : i32
    return %c0_i32, %c0_i32_0 : i32, i32
  }
  func.func @transform_2(%arg0: i32) -> (i32, i32) {
    %c0_i32 = arith.constant 0 : i32
    %c0_i32_0 = arith.constant 0 : i32
    return %arg0, %c0_i32 : i32, i32
  }
}

</mosaic_0001>

<llo_original>
// kernel: tpu_custom_call.1
$region0: #{tpu_custom_call.1}
  #allocation0 [shape = 'u32[]', space=smem, size = 0x4, offset = 0x4, fixed_abs, tag = 'smem constant byte address 0x4 - core index']
  #allocation1 [shape = 'u32[144,128]{1,0:T(1,128)}', space=vmem, size = 0x12000, scoped, tag = 'internal scratch']
  %s0 = inlined_call_operand.vmem [shape: f32[2,4,256], index: 0, kind: input, shape index: {}]
  %s1 = inlined_call_operand.vmem [shape: f32[32,4], index: 1, kind: input, shape index: {}]
  %s2 = inlined_call_operand.hbm [shape: f32[2,32], index: 2, kind: output, shape index: {}]
  %s3 = sld [smem:[#allocation0]]
  $region18: #{tpu_custom_call.1} parent=0
    _
  %s5 = ssub.s32 1, %s3
  %s6 = scalar_select 0, %s5, %s3
  $region1: #{tpu_custom_call.1} parent=0
    #allocation2 [shape = 'u8[1024]{0}', space=vmem, size = 0x400, scoped, tag = 'output window, operand 0, single buffered']
    #allocation3 [shape = 's32[1]{0}', space=sflag, size = 0x4, scoped, tag = 'scoped memory for tpu_custom_call.1']
    %7 = vsyncpa [#allocation3], 0
    // Predicated region
    $region2: #{tpu_custom_call.1} parent=1 // pred_check
      _
    $region3: #{tpu_custom_call.1} parent=1 // pred_check_branch
      %9 = sbr.rel (0) target = $region5
    $region4: #{tpu_custom_call.1} parent=1 // pred_region
      _
    $region5: #{tpu_custom_call.1} parent=1 // pred_fallthru
      _
    // Predicated region
    $region6: #{tpu_custom_call.1} parent=1 // pred_check
      _
    $region7: #{tpu_custom_call.1} parent=1 // pred_check_branch
      %11 = sbr.rel (0) target = $region9
    $region8: #{tpu_custom_call.1} parent=1 // pred_region
      _
    $region9: #{tpu_custom_call.1} parent=1 // pred_fallthru
      _
    %v12 = vld [vmem:[%s0] sm:$0xff]
    %v13 = vld [vmem:[%s0 + $0x8] sm:$0xff]
    %v14 = vld [vmem:[%s1] sm:$0xff]
    %v15 = vld [vmem:[%s1 + $0x8] sm:$0xff]
    %v16 = vld [vmem:[%s1 + $0x10] sm:$0xff]
    %v17 = vld [vmem:[%s1 + $0x18] sm:$0xff]
    %19 = vset.pattern.permute.xlu0 0
    %20 = vperm.xlu0 %19, %v14
    %v21 = vpop.permute.xlu0 %20
    %24 = vset.pattern.permute.xlu0 0
    %25 = vperm.xlu0 %24, %v15
    %v26 = vpop.permute.xlu0 %25
    %29 = vset.pattern.permute.xlu0 0
    %30 = vperm.xlu0 %29, %v16
    %v31 = vpop.permute.xlu0 %30
    %34 = vset.pattern.permute.xlu0 0
    %35 = vperm.xlu0 %34, %v17
    %v36 = vpop.permute.xlu0 %35
    %v40 = vlaneseq
    %v41 = vshrl.u32 %v40, 7
    %v42 = vsub.s32 0, %v41
    %v43 = vrot.slane %v12, %v42
    %v44 = vlaneseq
    %v45 = vshrl.u32 %v44, 7
    %v46 = vsub.s32 4, %v45
    %v47 = vrot.slane %v12, %v46
    %v48 = vlaneseq
    %v49 = vshrl.u32 %v48, 7
    %v50 = vsub.s32 0, %v49
    %v51 = vrot.slane %v13, %v50
    %v52 = vlaneseq
    %v53 = vshrl.u32 %v52, 7
    %v54 = vsub.s32 4, %v53
    %v55 = vrot.slane %v13, %v54
    %v60 = vlaneseq
    %v61 = vshrl.u32 %v60, 7
    %v62 = vsub.s32 0, %v61
    %v63 = vrot.slane %v43, %v62
    %v64 = vlaneseq
    %v65 = vshrl.u32 %v64, 7
    %v66 = vsub.s32 0, %v65
    %v67 = vrot.slane %v47, %v66
    %v68 = vlaneseq
    %v69 = vshrl.u32 %v68, 7
    %v70 = vsub.s32 0, %v69
    %v71 = vrot.slane %v51, %v70
    %v72 = vlaneseq
    %v73 = vshrl.u32 %v72, 7
    %v74 = vsub.s32 0, %v73
    %v75 = vrot.slane %v55, %v74
    %v76 = vmul.f32 %v21, %v63
    %v77 = vmul.f32 %v21, %v67
    %v78 = vmul.f32 %v26, %v63
    %v79 = vmul.f32 %v26, %v67
    %v80 = vmul.f32 %v31, %v63
    %v81 = vmul.f32 %v31, %v67
    %v82 = vmul.f32 %v36, %v63
    %v83 = vmul.f32 %v36, %v67
    %v84 = vmul.f32 %v21, %v71
    %v85 = vmul.f32 %v21, %v75
    %v86 = vmul.f32 %v26, %v71
    %v87 = vmul.f32 %v26, %v75
    %v88 = vmul.f32 %v31, %v71
    %v89 = vmul.f32 %v31, %v75
    %v90 = vmul.f32 %v36, %v71
    %v91 = vmul.f32 %v36, %v75
    %v92 = vadd.f32 %v76, 0.0
    %v93 = vadd.f32 %v77, 0.0
    %v94 = vadd.f32 %v78, 0.0
    %v95 = vadd.f32 %v79, 0.0
    %v96 = vadd.f32 %v80, 0.0
    %v97 = vadd.f32 %v81, 0.0
    %v98 = vadd.f32 %v82, 0.0
    %v99 = vadd.f32 %v83, 0.0
    %v100 = vadd.f32 %v84, 0.0
    %v101 = vadd.f32 %v85, 0.0
    %v102 = vadd.f32 %v86, 0.0
    %v103 = vadd.f32 %v87, 0.0
    %v104 = vadd.f32 %v88, 0.0
    %v105 = vadd.f32 %v89, 0.0
    %v106 = vadd.f32 %v90, 0.0
    %v107 = vadd.f32 %v91, 0.0
    %108 = vset.pattern.permute.xlu0 1
    %109 = vperm.xlu0 %108, %v14
    %v110 = vpop.permute.xlu0 %109
    %112 = vset.pattern.permute.xlu0 1
    %113 = vperm.xlu0 %112, %v15
    %v114 = vpop.permute.xlu0 %113
    %116 = vset.pattern.permute.xlu0 1
    %117 = vperm.xlu0 %116, %v16
    %v118 = vpop.permute.xlu0 %117
    %120 = vset.pattern.permute.xlu0 1
    %121 = vperm.xlu0 %120, %v17
    %v122 = vpop.permute.xlu0 %121
    %v124 = vlaneseq
    %v125 = vshrl.u32 %v124, 7
    %v126 = vsub.s32 1, %v125
    %v127 = vrot.slane %v12, %v126
    %v128 = vlaneseq
    %v129 = vshrl.u32 %v128, 7
    %v130 = vsub.s32 5, %v129
    %v131 = vrot.slane %v12, %v130
    %v132 = vlaneseq
    %v133 = vshrl.u32 %v132, 7
    %v134 = vsub.s32 1, %v133
    %v135 = vrot.slane %v13, %v134
    %v136 = vlaneseq
    %v137 = vshrl.u32 %v136, 7
    %v138 = vsub.s32 5, %v137
    %v139 = vrot.slane %v13, %v138
    %v144 = vlaneseq
    %v145 = vshrl.u32 %v144, 7
    %v146 = vsub.s32 1, %v145
    %v147 = vrot.slane %v127, %v146
    %v148 = vlaneseq
    %v149 = vshrl.u32 %v148, 7
    %v150 = vsub.s32 1, %v149
    %v151 = vrot.slane %v131, %v150
    %v152 = vlaneseq
    %v153 = vshrl.u32 %v152, 7
    %v154 = vsub.s32 1, %v153
    %v155 = vrot.slane %v135, %v154
    %v156 = vlaneseq
    %v157 = vshrl.u32 %v156, 7
    %v158 = vsub.s32 1, %v157
    %v159 = vrot.slane %v139, %v158
    %v160 = vmul.f32 %v110, %v147
    %v161 = vmul.f32 %v110, %v151
    %v162 = vmul.f32 %v114, %v147
    %v163 = vmul.f32 %v114, %v151
    %v164 = vmul.f32 %v118, %v147
    %v165 = vmul.f32 %v118, %v151
    %v166 = vmul.f32 %v122, %v147
    %v167 = vmul.f32 %v122, %v151
    %v168 = vmul.f32 %v110, %v155
    %v169 = vmul.f32 %v110, %v159
    %v170 = vmul.f32 %v114, %v155
    %v171 = vmul.f32 %v114, %v159
    %v172 = vmul.f32 %v118, %v155
    %v173 = vmul.f32 %v118, %v159
    %v174 = vmul.f32 %v122, %v155
    %v175 = vmul.f32 %v122, %v159
    %v176 = vadd.f32 %v92, %v160
    %v177 = vadd.f32 %v93, %v161
    %v178 = vadd.f32 %v94, %v162
    %v179 = vadd.f32 %v95, %v163
    %v180 = vadd.f32 %v96, %v164
    %v181 = vadd.f32 %v97, %v165
    %v182 = vadd.f32 %v98, %v166
    %v183 = vadd.f32 %v99, %v167
    %v184 = vadd.f32 %v100, %v168
    %v185 = vadd.f32 %v101, %v169
    %v186 = vadd.f32 %v102, %v170
    %v187 = vadd.f32 %v103, %v171
    %v188 = vadd.f32 %v104, %v172
    %v189 = vadd.f32 %v105, %v173
    %v190 = vadd.f32 %v106, %v174
    %v191 = vadd.f32 %v107, %v175
    %192 = vset.pattern.permute.xlu0 2
    %193 = vperm.xlu0 %192, %v14
    %v194 = vpop.permute.xlu0 %193
    %196 = vset.pattern.permute.xlu0 2
    %197 = vperm.xlu0 %196, %v15
    %v198 = vpop.permute.xlu0 %197
    %200 = vset.pattern.permute.xlu0 2
    %201 = vperm.xlu0 %200, %v16
    %v202 = vpop.permute.xlu0 %201
    %204 = vset.pattern.permute.xlu0 2
    %205 = vperm.xlu0 %204, %v17
    %v206 = vpop.permute.xlu0 %205
    %v208 = vlaneseq
    %v209 = vshrl.u32 %v208, 7
    %v210 = vsub.s32 2, %v209
    %v211 = vrot.slane %v12, %v210
    %v212 = vlaneseq
    %v213 = vshrl.u32 %v212, 7
    %v214 = vsub.s32 6, %v213
    %v215 = vrot.slane %v12, %v214
    %v216 = vlaneseq
    %v217 = vshrl.u32 %v216, 7
    %v218 = vsub.s32 2, %v217
    %v219 = vrot.slane %v13, %v218
    %v220 = vlaneseq
    %v221 = vshrl.u32 %v220, 7
    %v222 = vsub.s32 6, %v221
    %v223 = vrot.slane %v13, %v222
    %v228 = vlaneseq
    %v229 = vshrl.u32 %v228, 7
    %v230 = vsub.s32 2, %v229
    %v231 = vrot.slane %v211, %v230
    %v232 = vlaneseq
    %v233 = vshrl.u32 %v232, 7
    %v234 = vsub.s32 2, %v233
    %v235 = vrot.slane %v215, %v234
    %v236 = vlaneseq
    %v237 = vshrl.u32 %v236, 7
    %v238 = vsub.s32 2, %v237
    %v239 = vrot.slane %v219, %v238
    %v240 = vlaneseq
    %v241 = vshrl.u32 %v240, 7
    %v242 = vsub.s32 2, %v241
    %v243 = vrot.slane %v223, %v242
    %v244 = vmul.f32 %v194, %v231
    %v245 = vmul.f32 %v194, %v235
    %v246 = vmul.f32 %v198, %v231
    %v247 = vmul.f32 %v198, %v235
    %v248 = vmul.f32 %v202, %v231
    %v249 = vmul.f32 %v202, %v235
    %v250 = vmul.f32 %v206, %v231
    %v251 = vmul.f32 %v206, %v235
    %v252 = vmul.f32 %v194, %v239
    %v253 = vmul.f32 %v194, %v243
    %v254 = vmul.f32 %v198, %v239
    %v255 = vmul.f32 %v198, %v243
    %v256 = vmul.f32 %v202, %v239
    %v257 = vmul.f32 %v202, %v243
    %v258 = vmul.f32 %v206, %v239
    %v259 = vmul.f32 %v206, %v243
    %v260 = vadd.f32 %v176, %v244
    %v261 = vadd.f32 %v177, %v245
    %v262 = vadd.f32 %v178, %v246
    %v263 = vadd.f32 %v179, %v247
    %v264 = vadd.f32 %v180, %v248
    %v265 = vadd.f32 %v181, %v249
    %v266 = vadd.f32 %v182, %v250
    %v267 = vadd.f32 %v183, %v251
    %v268 = vadd.f32 %v184, %v252
    %v269 = vadd.f32 %v185, %v253
    %v270 = vadd.f32 %v186, %v254
    %v271 = vadd.f32 %v187, %v255
    %v272 = vadd.f32 %v188, %v256
    %v273 = vadd.f32 %v189, %v257
    %v274 = vadd.f32 %v190, %v258
    %v275 = vadd.f32 %v191, %v259
    %276 = vset.pattern.permute.xlu0 3
    %277 = vperm.xlu0 %276, %v14
    %v278 = vpop.permute.xlu0 %277
    %280 = vset.pattern.permute.xlu0 3
    %281 = vperm.xlu0 %280, %v15
    %v282 = vpop.permute.xlu0 %281
    %284 = vset.pattern.permute.xlu0 3
    %285 = vperm.xlu0 %284, %v16
    %v286 = vpop.permute.xlu0 %285
    %288 = vset.pattern.permute.xlu0 3
    %289 = vperm.xlu0 %288, %v17
    %v290 = vpop.permute.xlu0 %289
    %v292 = vlaneseq
    %v293 = vshrl.u32 %v292, 7
    %v294 = vsub.s32 3, %v293
    %v295 = vrot.slane %v12, %v294
    %v296 = vlaneseq
    %v297 = vshrl.u32 %v296, 7
    %v298 = vsub.s32 7, %v297
    %v299 = vrot.slane %v12, %v298
    %v300 = vlaneseq
    %v301 = vshrl.u32 %v300, 7
    %v302 = vsub.s32 3, %v301
    %v303 = vrot.slane %v13, %v302
    %v304 = vlaneseq
    %v305 = vshrl.u32 %v304, 7
    %v306 = vsub.s32 7, %v305
    %v307 = vrot.slane %v13, %v306
    %v312 = vlaneseq
    %v313 = vshrl.u32 %v312, 7
    %v314 = vsub.s32 3, %v313
    %v315 = vrot.slane %v295, %v314
    %v316 = vlaneseq
    %v317 = vshrl.u32 %v316, 7
    %v318 = vsub.s32 3, %v317
    %v319 = vrot.slane %v299, %v318
    %v320 = vlaneseq
    %v321 = vshrl.u32 %v320, 7
    %v322 = vsub.s32 3, %v321
    %v323 = vrot.slane %v303, %v322
    %v324 = vlaneseq
    %v325 = vshrl.u32 %v324, 7
    %v326 = vsub.s32 3, %v325
    %v327 = vrot.slane %v307, %v326
    %v328 = vmul.f32 %v278, %v315
    %v329 = vmul.f32 %v278, %v319
    %v330 = vmul.f32 %v282, %v315
    %v331 = vmul.f32 %v282, %v319
    %v332 = vmul.f32 %v286, %v315
    %v333 = vmul.f32 %v286, %v319
    %v334 = vmul.f32 %v290, %v315
    %v335 = vmul.f32 %v290, %v319
    %v336 = vmul.f32 %v278, %v323
    %v337 = vmul.f32 %v278, %v327
    %v338 = vmul.f32 %v282, %v323
    %v339 = vmul.f32 %v282, %v327
    %v340 = vmul.f32 %v286, %v323
    %v341 = vmul.f32 %v286, %v327
    %v342 = vmul.f32 %v290, %v323
    %v343 = vmul.f32 %v290, %v327
    %v344 = vadd.f32 %v260, %v328
    %v345 = vadd.f32 %v261, %v329
    %v346 = vadd.f32 %v262, %v330
    %v347 = vadd.f32 %v263, %v331
    %v348 = vadd.f32 %v264, %v332
    %v349 = vadd.f32 %v265, %v333
    %v350 = vadd.f32 %v266, %v334
    %v351 = vadd.f32 %v267, %v335
    %v352 = vadd.f32 %v268, %v336
    %v353 = vadd.f32 %v269, %v337
    %v354 = vadd.f32 %v270, %v338
    %v355 = vadd.f32 %v271, %v339
    %v356 = vadd.f32 %v272, %v340
    %v357 = vadd.f32 %v273, %v341
    %v358 = vadd.f32 %v274, %v342
    %v359 = vadd.f32 %v275, %v343
    %v360 = vmax.f32 %v344, 0.0
    %v361 = vmax.f32 %v345, 0.0
    %v362 = vmax.f32 %v346, 0.0
    %v363 = vmax.f32 %v347, 0.0
    %v364 = vmax.f32 %v348, 0.0
    %v365 = vmax.f32 %v349, 0.0
    %v366 = vmax.f32 %v350, 0.0
    %v367 = vmax.f32 %v351, 0.0
    %v368 = vmax.f32 %v352, 0.0
    %v369 = vmax.f32 %v353, 0.0
    %v370 = vmax.f32 %v354, 0.0
    %v371 = vmax.f32 %v355, 0.0
    %v372 = vmax.f32 %v356, 0.0
    %v373 = vmax.f32 %v357, 0.0
    %v374 = vmax.f32 %v358, 0.0
    %v375 = vmax.f32 %v359, 0.0
    %v376 = vadd.f32 %v360, %v361
    %377 = vadd.xlane.f32.xlu0 %v376
    %v378 = vpop.xlane.xlu0 %377
    %v379 = vadd.f32 %v362, %v363
    %380 = vadd.xlane.f32.xlu0 %v379
    %v381 = vpop.xlane.xlu0 %380
    %v382 = vadd.f32 %v364, %v365
    %383 = vadd.xlane.f32.xlu0 %v382
    %v384 = vpop.xlane.xlu0 %383
    %v385 = vadd.f32 %v366, %v367
    %386 = vadd.xlane.f32.xlu0 %v385
    %v387 = vpop.xlane.xlu0 %386
    %v388 = vadd.f32 %v368, %v369
    %389 = vadd.xlane.f32.xlu0 %v388
    %v390 = vpop.xlane.xlu0 %389
    %v391 = vadd.f32 %v370, %v371
    %392 = vadd.xlane.f32.xlu0 %v391
    %v393 = vpop.xlane.xlu0 %392
    %v394 = vadd.f32 %v372, %v373
    %395 = vadd.xlane.f32.xlu0 %v394
    %v396 = vpop.xlane.xlu0 %395
    %v397 = vadd.f32 %v374, %v375
    %398 = vadd.xlane.f32.xlu0 %v397
    %v399 = vpop.xlane.xlu0 %398
    %v400 = vrcp.pop 256.0
    %v401 = vmul.f32 %v378, %v400
    %v402 = vmul.f32 %v381, %v400
    %v403 = vmul.f32 %v384, %v400
    %v404 = vmul.f32 %v387, %v400
    %v405 = vmul.f32 %v390, %v400
    %v406 = vmul.f32 %v393, %v400
    %v407 = vmul.f32 %v396, %v400
    %v408 = vmul.f32 %v399, %v400
    %v417 = vlaneseq
    %v418 = vand.u32 %v417, 127
    %v419 = vlaneseq
    %v420 = vshrl.u32 %v419, 7
    %v421 = vsub.s32 %v418, %v420
    %v422 = vrot.slane %v401, %v421
    %v423 = vadd.s32 %v418, 4294967288
    %v424 = vlaneseq
    %v425 = vshrl.u32 %v424, 7
    %v426 = vsub.s32 %v423, %v425
    %v427 = vrot.slane %v402, %v426
    %vm428 = vcmask 130112
    %v429 = vsel %vm428, %v427, %v422
    %v430 = vadd.s32 %v418, 4294967280
    %v431 = vlaneseq
    %v432 = vshrl.u32 %v431, 7
    %v433 = vsub.s32 %v430, %v432
    %v434 = vrot.slane %v403, %v433
    %vm435 = vcmask 195712
    %v436 = vsel %vm435, %v434, %v429
    %v437 = vadd.s32 %v418, 4294967272
    %v438 = vlaneseq
    %v439 = vshrl.u32 %v438, 7
    %v440 = vsub.s32 %v437, %v439
    %v441 = vrot.slane %v404, %v440
    %vm442 = vcmask 261312
    %v443 = vsel %vm442, %v441, %v436
    %v444 = vlaneseq
    %v445 = vshrl.u32 %v444, 7
    %v446 = vsub.s32 %v418, %v445
    %v447 = vrot.slane %v405, %v446
    %v448 = vlaneseq
    %v449 = vshrl.u32 %v448, 7
    %v450 = vsub.s32 %v423, %v449
    %v451 = vrot.slane %v406, %v450
    %v452 = vsel %vm428, %v451, %v447
    %v453 = vlaneseq
    %v454 = vshrl.u32 %v453, 7
    %v455 = vsub.s32 %v430, %v454
    %v456 = vrot.slane %v407, %v455
    %v457 = vsel %vm435, %v456, %v452
    %v458 = vlaneseq
    %v459 = vshrl.u32 %v458, 7
    %v460 = vsub.s32 %v437, %v459
    %v461 = vrot.slane %v408, %v460
    %v462 = vsel %vm442, %v461, %v457
    %vm463 = vcmask 1041409
    %v464 = vsel %vm463, %v462, %v443
    %vm466 = vcmask 254976
    %467 = vst.msk [vmem:[#allocation2] sm:$0x3] %vm466, %v464
    // Predicated region
    $region10: #{tpu_custom_call.1} parent=1 // pred_check
      _
    $region11: #{tpu_custom_call.1} parent=1 // pred_check_branch
      %469 = sbr.rel (0) target = $region13
    $region12: #{tpu_custom_call.1} parent=1 // pred_region
      %s471 = ssub.s32 32, 32
      %472 = vsyncadd [#allocation3], %s471
      %s474 = sshll.u32 [#allocation2], 4
      %s475 = int_to_ptr.vmem [resolvable:$true] %s474
      %477 = dma.vmem_to_hbm [thread:$0]  %s475, 32, %s2, [#allocation3]
    $region13: #{tpu_custom_call.1} parent=1 // pred_fallthru
      _
    // Predicated region
    $region14: #{tpu_custom_call.1} parent=1 // pred_check
      _
    $region15: #{tpu_custom_call.1} parent=1 // pred_check_branch
      %479 = sbr.rel (0) target = $region17
    $region16: #{tpu_custom_call.1} parent=1 // pred_region
      %480 = dma.done [#allocation3], 32
    $region17: #{tpu_custom_call.1} parent=1 // pred_fallthru
      _
    %481 = vsyncpa [#allocation3], 1

</llo_original>
